<compile_context>
chip_gen: v7x
topology: tpu7x:2x2x1
jax: 0.10.0
libtpu: 0.0.40
codegen_flags: <defaults>
</compile_context>

<pallas_src>
import functools

import jax
import jax.numpy as jnp
from jax.experimental import pallas as pl
from jax.experimental.pallas import tpu as pltpu

LANE = 128


def mlp_kernel(xT_ref, w1t_ref, b1_ref, w2t_ref, b2_ref, w3t_ref, b3_ref, o_ref):
    # Batch-on-lane layout: every tensor below is (rows, tb) with tb on the lane axis.
    xT = xT_ref[...]                                                       # (F_pad, tb) bf16
    # Layer 1: native bf16 x bf16 MXU matmul, f32 accumulation.
    h1 = jnp.dot(w1t_ref[...], xT, preferred_element_type=jnp.float32)    # (H, tb)
    h1 = jnp.maximum(h1 + b1_ref[...], 0.0)                               # ReLU
    # Layer 2: tiny f32 matmul (K = H = 8).
    h2 = jnp.dot(w2t_ref[...], h1, preferred_element_type=jnp.float32)    # (H, tb)
    h2 = jnp.maximum(h2 + b2_ref[...], 0.0)                               # ReLU
    # Layer 3: (1, H) @ (H, tb) -> (1, tb); lane-dense row store.
    logits = jnp.dot(w3t_ref[...], h2, preferred_element_type=jnp.float32)
    o_ref[...] = jax.nn.sigmoid(logits + b3_ref[0, 0])                    # Sigmoid


def choose_tb(B, max_tb=2048, min_tiles=4):
    """Largest lane-aligned batch tile that still gives >= min_tiles grid steps."""
    tb = max_tb
    while tb > LANE and pl.cdiv(B, tb) < min_tiles:
        tb //= 2
    return tb


def prepare_params(w1, b1, w2, b2, w3, b3):
    """One-time weight prep: transpose to batch-on-lane layout, pad F -> F_pad,
    cast W1 to bf16 (only source of approximation; accumulation stays f32)."""
    F, H = w1.shape
    F_pad = pl.cdiv(F, LANE) * LANE
    w1t = jnp.zeros((H, F_pad), jnp.bfloat16).at[:, :F].set(
        jnp.transpose(w1).astype(jnp.bfloat16))                           # (H, F_pad)
    b1c = jnp.reshape(b1, (H, 1)).astype(jnp.float32)
    w2t = jnp.transpose(w2).astype(jnp.float32)                           # (H, H)
    b2c = jnp.reshape(b2, (H, 1)).astype(jnp.float32)
    w3t = jnp.reshape(w3, (H, 1)).T.astype(jnp.float32)                   # (1, H)
    b3s = jnp.reshape(b3, (1, 1)).astype(jnp.float32)                     # SMEM scalar
    return w1t, b1c, w2t, b2c, w3t, b3s


def prepare_inputs(x, tb):
    """One-time (per batch) input prep, hoisted out of the forward:
    transpose to (F, B), pad F -> F_pad and B -> B_pad, cast to bf16
    (exact: features are 0/1 one-hot)."""
    B, F = x.shape
    F_pad = pl.cdiv(F, LANE) * LANE
    B_pad = pl.cdiv(B, tb) * tb
    xT = jnp.zeros((F_pad, B_pad), jnp.bfloat16).at[:F, :B].set(
        jnp.transpose(x).astype(jnp.bfloat16))
    return xT


@functools.partial(jax.jit, static_argnames=("B", "tb"))
def iris_model_forward(xT, w1t, b1c, w2t, b2c, w3t, b3s, *, B, tb):
    """Forward pass on prepared inputs. xT: (F_pad, B_pad) bf16; returns (B, 1) f32."""
    F_pad, B_pad = xT.shape
    H = w1t.shape[0]
    n_tiles = B_pad // tb

    flops = 2 * B_pad * (F_pad * H + H * H + H) + 6 * B_pad * H
    bytes_accessed = (xT.size * 2 + B_pad * 4 + w1t.size * 2
                      + (w2t.size + w3t.size + 2 * H + 1) * 4)

    out = pl.pallas_call(
        mlp_kernel,
        out_shape=jax.ShapeDtypeStruct((1, B_pad), jnp.float32),
        grid=(n_tiles,),
        in_specs=[
            pl.BlockSpec((F_pad, tb), lambda i: (0, i)),   # x^T batch tile (bf16)
            pl.BlockSpec((H, F_pad), lambda i: (0, 0)),    # W1^T (VMEM-resident, bf16)
            pl.BlockSpec((H, 1), lambda i: (0, 0)),        # b1 column
            pl.BlockSpec((H, H), lambda i: (0, 0)),        # W2^T
            pl.BlockSpec((H, 1), lambda i: (0, 0)),        # b2 column
            pl.BlockSpec((1, H), lambda i: (0, 0)),        # W3^T row
            pl.BlockSpec(memory_space=pltpu.MemorySpace.SMEM),  # b3 scalar
        ],
        # Lane-dense output: each grid step stores one (1, tb) row slab.
        out_specs=pl.BlockSpec((1, tb), lambda i: (0, i)),
        compiler_params=pltpu.CompilerParams(
            dimension_semantics=("parallel",)),
        cost_estimate=pl.CostEstimate(
            flops=flops, transcendentals=B_pad, bytes_accessed=bytes_accessed),
    )(xT, w1t, b1c, w2t, b2c, w3t, b3s)

    # (1, B_pad) -> (B, 1), dropping batch padding (padded rows are garbage by design).
    return out.reshape(B_pad, 1)[:B]


def init_linear_params(key, fan_in, fan_out):
    # Mimic PyTorch nn.Linear default init: U(-1/sqrt(fan_in), 1/sqrt(fan_in)).
    kw, kb = jax.random.split(key)
    bound = 1.0 / jnp.sqrt(jnp.float32(fan_in))
    # Stored (fan_in, fan_out) so the math reads x @ W (already transposed vs torch).
    w = jax.random.uniform(kw, (fan_in, fan_out), jnp.float32, -bound, bound)
    b = jax.random.uniform(kb, (fan_out,), jnp.float32, -bound, bound)
    return w, b


if __name__ == "__main__":
    # Shapes consistent with the module:
    #   input_nodes = 117 (one-hot mushroom features), hidden_nodes = 8, output_nodes = 1
    B = 1024
    INPUT_NODES = 117
    HIDDEN_NODES = 8
    OUTPUT_NODES = 1

    key = jax.random.PRNGKey(0)
    k_x, k1, k2, k3 = jax.random.split(key, 4)

    # Deterministic "one-hot-ish" binary input, matching pd.get_dummies(dtype=int).
    x = (jax.random.uniform(k_x, (B, INPUT_NODES)) > 0.8).astype(jnp.float32)

    w1, b1 = init_linear_params(k1, INPUT_NODES, HIDDEN_NODES)
    w2, b2 = init_linear_params(k2, HIDDEN_NODES, HIDDEN_NODES)
    w3, b3 = init_linear_params(k3, HIDDEN_NODES, OUTPUT_NODES)

    tb = choose_tb(B)                 # B=1024 -> tb=256, 4 grid steps (>=2 per TC on v7x)
    params = prepare_params(w1, b1, w2, b2, w3, b3)      # once, outside the forward
    xT = prepare_inputs(x, tb)                           # once per batch, outside forward

    out = iris_model_forward(xT, *params, B=B, tb=tb)
    jax.block_until_ready(out)

    # Reference in plain JAX with the same bf16 rounding applied to W1 (x's bf16 cast
    # is exact since features are 0/1); f32 everywhere else, high-precision matmuls.
    hi = jax.lax.Precision.HIGHEST
    w1_bf = w1.astype(jnp.bfloat16).astype(jnp.float32)
    h1 = jnp.maximum(jnp.dot(x, w1_bf, precision=hi) + b1.reshape(1, -1), 0.0)
    h2 = jnp.maximum(jnp.dot(h1, w2, precision=hi) + b2.reshape(1, -1), 0.0)
    ref = jax.nn.sigmoid(jnp.dot(h2, w3, precision=hi) + b3.reshape(1, -1))

    assert out.shape == (B, OUTPUT_NODES)
    assert jnp.allclose(out, ref, atol=1e-4, rtol=1e-4)

    print("KERNEL_OK")
</pallas_src>

<mosaic_0001>
module attributes {stable_mosaic.version = 11 : i64} {
  func.func @mlp_kernel(%arg0: i32, %arg1: memref<128x256xbf16, #tpu.memory_space<vmem>>, %arg2: memref<8x128xbf16, #tpu.memory_space<vmem>>, %arg3: memref<8x1xf32, #tpu.memory_space<vmem>>, %arg4: memref<8x8xf32, #tpu.memory_space<vmem>>, %arg5: memref<8x1xf32, #tpu.memory_space<vmem>>, %arg6: memref<1x8xf32, #tpu.memory_space<vmem>>, %arg7: memref<1x1xf32, #tpu.memory_space<smem>>, %arg8: memref<1x256xf32, #tpu.memory_space<vmem>>) attributes {dimension_semantics = [#tpu.dimension_semantics<parallel>], iteration_bounds = array<i64: 4>, scalar_prefetch = 0 : i64, scratch_operands = 0 : i64, tpu.core_type = #tpu.core_type<tc>, window_params = [{transform_indices = @transform_0, window_bounds = array<i64: 128, 256>}, {pipeline_mode = #tpu.pipeline_mode<synchronous>, transform_indices = @transform_1, window_bounds = array<i64: 8, 128>}, {pipeline_mode = #tpu.pipeline_mode<synchronous>, transform_indices = @transform_2, window_bounds = array<i64: 8, 1>}, {pipeline_mode = #tpu.pipeline_mode<synchronous>, transform_indices = @transform_3, window_bounds = array<i64: 8, 8>}, {pipeline_mode = #tpu.pipeline_mode<synchronous>, transform_indices = @transform_4, window_bounds = array<i64: 8, 1>}, {pipeline_mode = #tpu.pipeline_mode<synchronous>, transform_indices = @transform_5, window_bounds = array<i64: 1, 8>}, {transform_indices = @transform_6, window_bounds = array<i64: 1, 1>}, {transform_indices = @transform_7, window_bounds = array<i64: 1, 256>}]} {
    %c0 = arith.constant 0 : index
    %c0_0 = arith.constant 0 : index
    %0 = vector.load %arg1[%c0, %c0_0] : memref<128x256xbf16, #tpu.memory_space<vmem>>, vector<128x256xbf16>
    %c0_1 = arith.constant 0 : index
    %c0_2 = arith.constant 0 : index
    %1 = vector.load %arg2[%c0_1, %c0_2] : memref<8x128xbf16, #tpu.memory_space<vmem>>, vector<8x128xbf16>
    %cst = arith.constant dense<0.000000e+00> : vector<8x256xf32>
    %2 = tpu.matmul %1, %0, %cst {dimension_numbers = #tpu.dot_dimension_numbers<[1], [0], [0], [1], [0, 0, 1, 1], [], []>} : vector<8x128xbf16>, vector<128x256xbf16>, vector<8x256xf32> -> vector<8x256xf32>
    %c0_3 = arith.constant 0 : index
    %c0_4 = arith.constant 0 : index
    %3 = vector.load %arg3[%c0_3, %c0_4] : memref<8x1xf32, #tpu.memory_space<vmem>>, vector<8x1xf32>
    %4 = vector.broadcast %3 : vector<8x1xf32> to vector<8x256xf32>
    %5 = arith.addf %2, %4 : vector<8x256xf32>
    %cst_5 = arith.constant 0.000000e+00 : f32
    %6 = vector.broadcast %cst_5 : f32 to vector<8x256xf32>
    %7 = arith.maximumf %5, %6 : vector<8x256xf32>
    %c0_6 = arith.constant 0 : index
    %c0_7 = arith.constant 0 : index
    %8 = vector.load %arg4[%c0_6, %c0_7] : memref<8x8xf32, #tpu.memory_space<vmem>>, vector<8x8xf32>
    %cst_8 = arith.constant dense<0.000000e+00> : vector<8x256xf32>
    %9 = tpu.matmul %8, %7, %cst_8 {dimension_numbers = #tpu.dot_dimension_numbers<[1], [0], [0], [1], [0, 0, 1, 1], [], []>} : vector<8x8xf32>, vector<8x256xf32>, vector<8x256xf32> -> vector<8x256xf32>
    %c0_9 = arith.constant 0 : index
    %c0_10 = arith.constant 0 : index
    %10 = vector.load %arg5[%c0_9, %c0_10] : memref<8x1xf32, #tpu.memory_space<vmem>>, vector<8x1xf32>
    %11 = vector.broadcast %10 : vector<8x1xf32> to vector<8x256xf32>
    %12 = arith.addf %9, %11 : vector<8x256xf32>
    %cst_11 = arith.constant 0.000000e+00 : f32
    %13 = vector.broadcast %cst_11 : f32 to vector<8x256xf32>
    %14 = arith.maximumf %12, %13 : vector<8x256xf32>
    %c0_12 = arith.constant 0 : index
    %c0_13 = arith.constant 0 : index
    %15 = vector.load %arg6[%c0_12, %c0_13] : memref<1x8xf32, #tpu.memory_space<vmem>>, vector<1x8xf32>
    %cst_14 = arith.constant dense<0.000000e+00> : vector<1x256xf32>
    %16 = tpu.matmul %15, %14, %cst_14 {dimension_numbers = #tpu.dot_dimension_numbers<[1], [0], [0], [1], [0, 0, 1, 1], [], []>} : vector<1x8xf32>, vector<8x256xf32>, vector<1x256xf32> -> vector<1x256xf32>
    %c0_15 = arith.constant 0 : index
    %c0_16 = arith.constant 0 : index
    %17 = memref.load %arg7[%c0_15, %c0_16] : memref<1x1xf32, #tpu.memory_space<smem>>
    %18 = vector.broadcast %17 : f32 to vector<1x256xf32>
    %19 = arith.addf %16, %18 : vector<1x256xf32>
    %20 = arith.negf %19 : vector<1x256xf32>
    %21 = math.exp %20 : vector<1x256xf32>
    %cst_17 = arith.constant 1.000000e+00 : f32
    %22 = vector.broadcast %cst_17 : f32 to vector<1x256xf32>
    %23 = arith.addf %22, %21 : vector<1x256xf32>
    %24 = arith.divf %22, %23 : vector<1x256xf32>
    %c0_18 = arith.constant 0 : index
    %c0_19 = arith.constant 0 : index
    %25 = vector.load %arg8[%c0_18, %c0_19] : memref<1x256xf32, #tpu.memory_space<vmem>>, vector<1x256xf32>
    tpu.vector_store %arg8[%c0_18, %c0_19], %24 {strides = array<i32>} : memref<1x256xf32, #tpu.memory_space<vmem>>, vector<1x256xf32>,
    return
  }
  func.func @transform_0(%arg0: i32) -> (i32, i32) {
    %c0_i32 = arith.constant 0 : i32
    %c0_i32_0 = arith.constant 0 : i32
    return %c0_i32, %arg0 : i32, i32
  }
  func.func @transform_1(%arg0: i32) -> (i32, i32) {
    %c0_i32 = arith.constant 0 : i32
    %c0_i32_0 = arith.constant 0 : i32
    %c0_i32_1 = arith.constant 0 : i32
    return %c0_i32, %c0_i32_0 : i32, i32
  }
  func.func @transform_2(%arg0: i32) -> (i32, i32) {
    %c0_i32 = arith.constant 0 : i32
    %c0_i32_0 = arith.constant 0 : i32
    %c0_i32_1 = arith.constant 0 : i32
    return %c0_i32, %c0_i32_0 : i32, i32
  }
  func.func @transform_3(%arg0: i32) -> (i32, i32) {
    %c0_i32 = arith.constant 0 : i32
    %c0_i32_0 = arith.constant 0 : i32
    %c0_i32_1 = arith.constant 0 : i32
    return %c0_i32, %c0_i32_0 : i32, i32
  }
  func.func @transform_4(%arg0: i32) -> (i32, i32) {
    %c0_i32 = arith.constant 0 : i32
    %c0_i32_0 = arith.constant 0 : i32
    %c0_i32_1 = arith.constant 0 : i32
    return %c0_i32, %c0_i32_0 : i32, i32
  }
  func.func @transform_5(%arg0: i32) -> (i32, i32) {
    %c0_i32 = arith.constant 0 : i32
    %c0_i32_0 = arith.constant 0 : i32
    %c0_i32_1 = arith.constant 0 : i32
    return %c0_i32, %c0_i32_0 : i32, i32
  }
  func.func @transform_6(%arg0: i32) -> (i32, i32) {
    %c0_i32 = arith.constant 0 : i32
    %c0_i32_0 = arith.constant 0 : i32
    %c0_i32_1 = arith.constant 0 : i32
    return %c0_i32, %c0_i32_0 : i32, i32
  }
  func.func @transform_7(%arg0: i32) -> (i32, i32) {
    %c0_i32 = arith.constant 0 : i32
    %c0_i32_0 = arith.constant 0 : i32
    return %c0_i32, %arg0 : i32, i32
  }
}

</mosaic_0001>

<llo_original>
// kernel: iris_model_forward.1
$region0: #{iris_model_forward.1}
  #allocation0 [shape = 'u32[]', space=smem, size = 0x4, offset = 0x4, fixed_abs, tag = 'smem constant byte address 0x4 - core index']
  #allocation1 [shape = 'u32[144,128]{1,0:T(1,128)}', space=vmem, size = 0x12000, scoped, tag = 'internal scratch']
  #allocation2 [shape = 'f32[1,1]{1,0:T(1,128)S(6)}', space=smem, size = 0x200, scoped, tag = 'scoped memory for iris_model_forward.1']
  %s0 = inlined_call_operand.hbm [shape: bf16[128,1024], index: 0, kind: input, shape index: {}]
  %s1 = inlined_call_operand.vmem [shape: bf16[8,128], index: 1, kind: input, shape index: {}]
  %s2 = inlined_call_operand.vmem [shape: f32[8,1], index: 2, kind: input, shape index: {}]
  %s3 = inlined_call_operand.vmem [shape: f32[8,8], index: 3, kind: input, shape index: {}]
  %s4 = inlined_call_operand.vmem [shape: f32[8,1], index: 4, kind: input, shape index: {}]
  %s5 = inlined_call_operand.vmem [shape: f32[1,8], index: 5, kind: input, shape index: {}]
  %s6 = inlined_call_operand.<no memory space> [shape: f32[1,1], index: 6, kind: input, shape index: {}]
  %s7 = inlined_call_operand.hbm [shape: f32[1,1024], index: 7, kind: output, shape index: {}]
  %s8 = sld [smem:[#allocation0]]
  $region65: #{iris_model_forward.1} parent=0
    _
  %s10 = ssub.s32 1, %s8
  %s11 = scalar_select 0, %s10, %s8
  %12 = sst [smem:[#allocation2]] %s6
  $region1: #{iris_model_forward.1} parent=0
    #allocation3 [shape = 'u8[131072]{0}', space=vmem, size = 0x20000, scoped, tag = 'input window, operand 0']
    #allocation4 [shape = 's32[2]{0}', space=sflag, size = 0x8, scoped, tag = 'scoped memory for iris_model_forward.1']
    #allocation5 [shape = 's32[2]{0}', space=sflag, size = 0x8, scoped, tag = 'scoped memory for iris_model_forward.1']
    #allocation6 [shape = 'u8[2048]{0}', space=vmem, size = 0x800, scoped, tag = 'output window, operand 0']
    %13 = vsyncpa [#allocation4], 0
    %s14 = scalar_lea.sflag [#allocation4], 1
    %15 = vsyncpa %s14, 0
    %16 = vsyncpa [#allocation5], 0
    %s17 = scalar_lea.sflag [#allocation5], 1
    %18 = vsyncpa %s17, 0
    loop: start=0, step=1, limit=6
    $region2: #{iris_model_forward.1} parent=1 // loop_pre_header
      _
    $region3: #{iris_model_forward.1} parent=1 // loop_header
      %s20 = sphi 0, %s24
      %p21 = scmp.ge.s32.totalorder %s20, 6
      %s30 = sphi 0, %s32
      %s33 = sphi 0, %s30
      %s34 = sphi 0, %s33
      %s50 = sphi 0, %s34
      %s54 = sphi 0, %s54
      %s56 = sphi 0, %s54
      %s57 = sphi 0, %s56
      %s71 = sphi 0, %s57
      %s75 = sphi 0, %s75
      %s77 = sphi 0, %s75
      %s78 = sphi 0, %s77
      %s92 = sphi 0, %s78
      %s96 = sphi 0, %s96
      %s98 = sphi 0, %s96
      %s99 = sphi 0, %s98
      %s113 = sphi 0, %s99
      %s117 = sphi 0, %s117
      %s119 = sphi 0, %s117
      %s120 = sphi 0, %s119
      %s134 = sphi 0, %s120
      %s138 = sphi 0, %s138
      %s140 = sphi 0, %s138
      %s141 = sphi 0, %s140
      %s155 = sphi 0, %s141
      %s159 = sphi 0, %s159
      %s161 = sphi 0, %s159
      %s162 = sphi 0, %s161
      %s176 = sphi 0, %s162
      %s182 = sphi 0, %s184
      %s185 = sphi 0, %s182
      %s186 = sphi 0, %s185
      %s202 = sphi 0, %s186
    $region4: #{iris_model_forward.1} parent=1 // loop_header_branch
      %23 = sbr.rel (%p21) target = $region8
    $region5: #{iris_model_forward.1} parent=1 // loop_body
      %s25 = ssub.s32 %s20, 1
      %s26 = ssub.s32 %s20, 2
      %s27 = sadd.s32 %s20, 1
      %s28 = ssub.s32 %s20, %s27
      %p29 = scmp.eq.s32.totalorder %s28, 0
      %s31 = sadd.s32 %s30, 1
      %s32 = scalar_select %p29, %s30, %s31
      %p35 = pneg %p29
      %p36 = scmp.eq.s32.totalorder %s20, 3
      %p37 = por %p35, %p36
      %p38 = scmp.ne.s32.totalorder %s30, %s33
      %p39 = scmp.eq.s32.totalorder %s20, 0
      %p40 = por %p38, %p39
      %p41 = scmp.ne.s32.totalorder %s30, %s33
      %p42 = scmp.eq.s32.totalorder %s25, 3
      %p43 = por %p41, %p42
      %p44 = scmp.ne.s32.totalorder %s33, %s34
      %p45 = scmp.eq.s32.totalorder %s25, 0
      %p46 = por %p44, %p45
      %p47 = scmp.ne.s32.totalorder %s33, %s34
      %p48 = scmp.eq.s32.totalorder %s26, 3
      %p49 = por %p47, %p48
      %p51 = scmp.ne.s32.totalorder %s34, %s50
      %p52 = scmp.eq.s32.totalorder %s26, 0
      %p53 = por %p51, %p52
      %s55 = sadd.s32 %s54, 1
      %p58 = scmp.eq.s32.totalorder %s20, 3
      %p59 = scmp.ne.s32.totalorder %s54, %s56
      %p60 = scmp.eq.s32.totalorder %s20, 0
      %p61 = por %p59, %p60
      %p62 = scmp.ne.s32.totalorder %s54, %s56
      %p63 = scmp.eq.s32.totalorder %s25, 3
      %p64 = por %p62, %p63
      %p65 = scmp.ne.s32.totalorder %s56, %s57
      %p66 = scmp.eq.s32.totalorder %s25, 0
      %p67 = por %p65, %p66
      %p68 = scmp.ne.s32.totalorder %s56, %s57
      %p69 = scmp.eq.s32.totalorder %s26, 3
      %p70 = por %p68, %p69
      %p72 = scmp.ne.s32.totalorder %s57, %s71
      %p73 = scmp.eq.s32.totalorder %s26, 0
      %p74 = por %p72, %p73
      %s76 = sadd.s32 %s75, 1
      %p79 = scmp.eq.s32.totalorder %s20, 3
      %p80 = scmp.ne.s32.totalorder %s75, %s77
      %p81 = scmp.eq.s32.totalorder %s20, 0
      %p82 = por %p80, %p81
      %p83 = scmp.ne.s32.totalorder %s75, %s77
      %p84 = scmp.eq.s32.totalorder %s25, 3
      %p85 = por %p83, %p84
      %p86 = scmp.ne.s32.totalorder %s77, %s78
      %p87 = scmp.eq.s32.totalorder %s25, 0
      %p88 = por %p86, %p87
      %p89 = scmp.ne.s32.totalorder %s77, %s78
      %p90 = scmp.eq.s32.totalorder %s26, 3
      %p91 = por %p89, %p90
      %p93 = scmp.ne.s32.totalorder %s78, %s92
      %p94 = scmp.eq.s32.totalorder %s26, 0
      %p95 = por %p93, %p94
      %s97 = sadd.s32 %s96, 1
      %p100 = scmp.eq.s32.totalorder %s20, 3
      %p101 = scmp.ne.s32.totalorder %s96, %s98
      %p102 = scmp.eq.s32.totalorder %s20, 0
      %p103 = por %p101, %p102
      %p104 = scmp.ne.s32.totalorder %s96, %s98
      %p105 = scmp.eq.s32.totalorder %s25, 3
      %p106 = por %p104, %p105
      %p107 = scmp.ne.s32.totalorder %s98, %s99
      %p108 = scmp.eq.s32.totalorder %s25, 0
      %p109 = por %p107, %p108
      %p110 = scmp.ne.s32.totalorder %s98, %s99
      %p111 = scmp.eq.s32.totalorder %s26, 3
      %p112 = por %p110, %p111
      %p114 = scmp.ne.s32.totalorder %s99, %s113
      %p115 = scmp.eq.s32.totalorder %s26, 0
      %p116 = por %p114, %p115
      %s118 = sadd.s32 %s117, 1
      %p121 = scmp.eq.s32.totalorder %s20, 3
      %p122 = scmp.ne.s32.totalorder %s117, %s119
      %p123 = scmp.eq.s32.totalorder %s20, 0
      %p124 = por %p122, %p123
      %p125 = scmp.ne.s32.totalorder %s117, %s119
      %p126 = scmp.eq.s32.totalorder %s25, 3
      %p127 = por %p125, %p126
      %p128 = scmp.ne.s32.totalorder %s119, %s120
      %p129 = scmp.eq.s32.totalorder %s25, 0
      %p130 = por %p128, %p129
      %p131 = scmp.ne.s32.totalorder %s119, %s120
      %p132 = scmp.eq.s32.totalorder %s26, 3
      %p133 = por %p131, %p132
      %p135 = scmp.ne.s32.totalorder %s120, %s134
      %p136 = scmp.eq.s32.totalorder %s26, 0
      %p137 = por %p135, %p136
      %s139 = sadd.s32 %s138, 1
      %p142 = scmp.eq.s32.totalorder %s20, 3
      %p143 = scmp.ne.s32.totalorder %s138, %s140
      %p144 = scmp.eq.s32.totalorder %s20, 0
      %p145 = por %p143, %p144
      %p146 = scmp.ne.s32.totalorder %s138, %s140
      %p147 = scmp.eq.s32.totalorder %s25, 3
      %p148 = por %p146, %p147
      %p149 = scmp.ne.s32.totalorder %s140, %s141
      %p150 = scmp.eq.s32.totalorder %s25, 0
      %p151 = por %p149, %p150
      %p152 = scmp.ne.s32.totalorder %s140, %s141
      %p153 = scmp.eq.s32.totalorder %s26, 3
      %p154 = por %p152, %p153
      %p156 = scmp.ne.s32.totalorder %s141, %s155
      %p157 = scmp.eq.s32.totalorder %s26, 0
      %p158 = por %p156, %p157
      %s160 = sadd.s32 %s159, 1
      %p163 = scmp.eq.s32.totalorder %s20, 3
      %p164 = scmp.ne.s32.totalorder %s159, %s161
      %p165 = scmp.eq.s32.totalorder %s20, 0
      %p166 = por %p164, %p165
      %p167 = scmp.ne.s32.totalorder %s159, %s161
      %p168 = scmp.eq.s32.totalorder %s25, 3
      %p169 = por %p167, %p168
      %p170 = scmp.ne.s32.totalorder %s161, %s162
      %p171 = scmp.eq.s32.totalorder %s25, 0
      %p172 = por %p170, %p171
      %p173 = scmp.ne.s32.totalorder %s161, %s162
      %p174 = scmp.eq.s32.totalorder %s26, 3
      %p175 = por %p173, %p174
      %p177 = scmp.ne.s32.totalorder %s162, %s176
      %p178 = scmp.eq.s32.totalorder %s26, 0
      %p179 = por %p177, %p178
      %s180 = ssub.s32 %s20, %s27
      %p181 = scmp.eq.s32.totalorder %s180, 0
      %s183 = sadd.s32 %s182, 1
      %s184 = scalar_select %p181, %s182, %s183
      %p187 = pneg %p181
      %p188 = scmp.eq.s32.totalorder %s20, 3
      %p189 = por %p187, %p188
      %p190 = scmp.ne.s32.totalorder %s182, %s185
      %p191 = scmp.eq.s32.totalorder %s20, 0
      %p192 = por %p190, %p191
      %p193 = scmp.ne.s32.totalorder %s182, %s185
      %p194 = scmp.eq.s32.totalorder %s25, 3
      %p195 = por %p193, %p194
      %p196 = scmp.ne.s32.totalorder %s185, %s186
      %p197 = scmp.eq.s32.totalorder %s25, 0
      %p198 = por %p196, %p197
      %p199 = scmp.ne.s32.totalorder %s185, %s186
      %p200 = scmp.eq.s32.totalorder %s26, 3
      %p201 = por %p199, %p200
      %p203 = scmp.ne.s32.totalorder %s186, %s202
      %p204 = scmp.eq.s32.totalorder %s26, 0
      %p205 = por %p203, %p204
      %p206 = scmp.le.s32.totalorder 1, %s20
      %p207 = scmp.lt.s32.totalorder %s20, 5
      %p208 = pnand %p206, %p207
      %p209 = pneg %p208
      // Predicated region
      $region9: #{iris_model_forward.1} parent=5 // pred_check
        _
      $region10: #{iris_model_forward.1} parent=5 // pred_check_branch
        %211 = sbr.rel (%p208) target = $region12
      $region11: #{iris_model_forward.1} parent=5 // pred_region
        %s212 = ssub.s32 %s20, 1
        // Predicated region
        $region13: #{iris_model_forward.1} parent=11 // pred_check
          %p213 = pneg %p67
        $region14: #{iris_model_forward.1} parent=11 // pred_check_branch
          %215 = sbr.rel (%p213) target = $region16
        $region15: #{iris_model_forward.1} parent=11 // pred_region
          _
        $region16: #{iris_model_forward.1} parent=11 // pred_fallthru
          _
        // Predicated region
        $region17: #{iris_model_forward.1} parent=11 // pred_check
          %p216 = pneg %p88
        $region18: #{iris_model_forward.1} parent=11 // pred_check_branch
          %218 = sbr.rel (%p216) target = $region20
        $region19: #{iris_model_forward.1} parent=11 // pred_region
          _
        $region20: #{iris_model_forward.1} parent=11 // pred_fallthru
          _
        // Predicated region
        $region21: #{iris_model_forward.1} parent=11 // pred_check
          %p219 = pneg %p109
        $region22: #{iris_model_forward.1} parent=11 // pred_check_branch
          %221 = sbr.rel (%p219) target = $region24
        $region23: #{iris_model_forward.1} parent=11 // pred_region
          _
        $region24: #{iris_model_forward.1} parent=11 // pred_fallthru
          _
        // Predicated region
        $region25: #{iris_model_forward.1} parent=11 // pred_check
          %p222 = pneg %p130
        $region26: #{iris_model_forward.1} parent=11 // pred_check_branch
          %224 = sbr.rel (%p222) target = $region28
        $region27: #{iris_model_forward.1} parent=11 // pred_region
          _
        $region28: #{iris_model_forward.1} parent=11 // pred_fallthru
          _
        // Predicated region
        $region29: #{iris_model_forward.1} parent=11 // pred_check
          %p225 = pneg %p151
        $region30: #{iris_model_forward.1} parent=11 // pred_check_branch
          %227 = sbr.rel (%p225) target = $region32
        $region31: #{iris_model_forward.1} parent=11 // pred_region
          _
        $region32: #{iris_model_forward.1} parent=11 // pred_fallthru
          _
        // Predicated region
        $region33: #{iris_model_forward.1} parent=11 // pred_check
          %p228 = pneg %p172
        $region34: #{iris_model_forward.1} parent=11 // pred_check_branch
          %230 = sbr.rel (%p228) target = $region36
        $region35: #{iris_model_forward.1} parent=11 // pred_region
          _
        $region36: #{iris_model_forward.1} parent=11 // pred_fallthru
          _
      $region12: #{iris_model_forward.1} parent=5 // pred_fallthru
        _
      %p231 = scmp.lt.s32.totalorder %s20, 4
      // Predicated region
      $region37: #{iris_model_forward.1} parent=5 // pred_check
        %p232 = pneg %p231
      $region38: #{iris_model_forward.1} parent=5 // pred_check_branch
        %234 = sbr.rel (%p232) target = $region40
      $region39: #{iris_model_forward.1} parent=5 // pred_region
        // Predicated region
        $region41: #{iris_model_forward.1} parent=39 // pred_check
          %p235 = pneg %p40
        $region42: #{iris_model_forward.1} parent=39 // pred_check_branch
          %237 = sbr.rel (%p235) target = $region44
        $region43: #{iris_model_forward.1} parent=39 // pred_region
          %s238 = sand.u32 %s30, 1
          %s239 = scalar_lea.sflag [#allocation4], %s238
          %s240 = sand.u32 %s30, 1
          %s241 = smul.addr %s240, 128
          %s242 = scalar_lea.vmem [#allocation3], %s241
          %s243 = smul.u32 2, %s20
          %s245 = ssub.s32 2048, 2048
          %246 = vsyncadd %s239, %s245
          %s247 = smul.addr %s243, 64
          %s248 = scalar_lea.hbm %s0, %s247
          %s249 = sshll.u32 %s242, 4
          %s250 = int_to_ptr.vmem [resolvable:$true] %s249
          %255 = dma.hbm_to_vmem [thread:$0]  %s248, 2048, %s250, %s239, 512, 128, 8
        $region44: #{iris_model_forward.1} parent=39 // pred_fallthru
          _
      $region40: #{iris_model_forward.1} parent=5 // pred_fallthru
        _
      %p256 = scmp.le.s32.totalorder 1, %s20
      %p257 = scmp.lt.s32.totalorder %s20, 5
      %p258 = pnand %p256, %p257
      %p259 = pneg %p258
      // Predicated region
      $region45: #{iris_model_forward.1} parent=5 // pred_check
        _
      $region46: #{iris_model_forward.1} parent=5 // pred_check_branch
        %261 = sbr.rel (%p258) target = $region48
      $region47: #{iris_model_forward.1} parent=5 // pred_region
        %s262 = ssub.s32 %s20, 1
        %s263 = sand.u32 %s33, 1
        %s264 = scalar_lea.sflag [#allocation4], %s263
        %s265 = sand.u32 %s33, 1
        %s266 = smul.addr %s265, 128
        %s267 = scalar_lea.vmem [#allocation3], %s266
        // Predicated region
        $region49: #{iris_model_forward.1} parent=47 // pred_check
          %p268 = pneg %p46
        $region50: #{iris_model_forward.1} parent=47 // pred_check_branch
          %270 = sbr.rel (%p268) target = $region52
        $region51: #{iris_model_forward.1} parent=47 // pred_region
          %271 = dma.done %s264, 2048
        $region52: #{iris_model_forward.1} parent=47 // pred_fallthru
          _
        %s272 = sand.u32 %s33, 1
        %s273 = scalar_lea.sflag [#allocation4], %s272
        %s274 = sand.u32 %s33, 1
        %s275 = smul.addr %s274, 128
        %s276 = scalar_lea.vmem [#allocation3], %s275
        %p277 = pneg %p46
        %p278 = pneg %p43
        %p279 = pneg %p67
        %p280 = pneg %p64
        %p281 = pneg %p88
        %p282 = pneg %p85
        %p283 = pneg %p109
        %p284 = pneg %p106
        %p285 = pneg %p130
        %p286 = pneg %p127
        %p287 = pneg %p151
        %p288 = pneg %p148
        %p289 = pneg %p172
        %p290 = pneg %p169
        %p291 = pneg %p198
        %p292 = pneg %p195
        %s293 = sand.u32 %s185, 1
        %s294 = scalar_lea.sflag [#allocation5], %s293
        %s295 = sand.u32 %s185, 1
        %s296 = smul.addr %s295, 2
        %s297 = scalar_lea.vmem [#allocation6], %s296
        %s298 = smul.u32 2, %s25
        %s299 = smul.u32 2, %s25
        %v301 = vld [vmem:[%s267] sm:$0xff]
        %v302 = vld [vmem:[%s267 + $0x8] sm:$0xff]
        %v303 = vld [vmem:[%s267 + $0x10] sm:$0xff]
        %v304 = vld [vmem:[%s267 + $0x18] sm:$0xff]
        %v305 = vld [vmem:[%s267 + $0x20] sm:$0xff]
        %v306 = vld [vmem:[%s267 + $0x28] sm:$0xff]
        %v307 = vld [vmem:[%s267 + $0x30] sm:$0xff]
        %v308 = vld [vmem:[%s267 + $0x38] sm:$0xff]
        %v309 = vld [vmem:[%s267 + $0x40] sm:$0xff]
        %v310 = vld [vmem:[%s267 + $0x48] sm:$0xff]
        %v311 = vld [vmem:[%s267 + $0x50] sm:$0xff]
        %v312 = vld [vmem:[%s267 + $0x58] sm:$0xff]
        %v313 = vld [vmem:[%s267 + $0x60] sm:$0xff]
        %v314 = vld [vmem:[%s267 + $0x68] sm:$0xff]
        %v315 = vld [vmem:[%s267 + $0x70] sm:$0xff]
        %v316 = vld [vmem:[%s267 + $0x78] sm:$0xff]
        %v317 = vld [vmem:[%s1] sm:$0xf]
        %v318 = vld [vmem:[%s2] sm:$0xff]
        %320 = vset.pattern.permute.xlu0 0
        %321 = vperm.xlu0 %320, %v318
        %v322 = vpop.permute.xlu0 %321
        %v340 = vunpack.c.l.b16 %v301
        %v341 = vunpack.c.h.b16 %v301
        %v342 = vunpack.c.l.b16 %v302
        %v343 = vunpack.c.h.b16 %v302
        %v344 = vunpack.c.l.b16 %v303
        %v345 = vunpack.c.h.b16 %v303
        %v346 = vunpack.c.l.b16 %v304
        %v347 = vunpack.c.h.b16 %v304
        %v348 = vunpack.c.l.b16 %v305
        %v349 = vunpack.c.h.b16 %v305
        %v350 = vunpack.c.l.b16 %v306
        %v351 = vunpack.c.h.b16 %v306
        %v352 = vunpack.c.l.b16 %v307
        %v353 = vunpack.c.h.b16 %v307
        %v354 = vunpack.c.l.b16 %v308
        %v355 = vunpack.c.h.b16 %v308
        %v356 = vunpack.c.l.b16 %v309
        %v357 = vunpack.c.h.b16 %v309
        %v358 = vunpack.c.l.b16 %v310
        %v359 = vunpack.c.h.b16 %v310
        %v360 = vunpack.c.l.b16 %v311
        %v361 = vunpack.c.h.b16 %v311
        %v362 = vunpack.c.l.b16 %v312
        %v363 = vunpack.c.h.b16 %v312
        %v364 = vunpack.c.l.b16 %v313
        %v365 = vunpack.c.h.b16 %v313
        %v366 = vunpack.c.l.b16 %v314
        %v367 = vunpack.c.h.b16 %v314
        %v368 = vunpack.c.l.b16 %v315
        %v369 = vunpack.c.h.b16 %v315
        %v370 = vunpack.c.l.b16 %v316
        %v371 = vunpack.c.h.b16 %v316
        %v372 = vpack.c.b16 %v342, %v340
        %v373 = vpack.c.b16 %v343, %v341
        %v374 = vpack.c.b16 %v346, %v344
        %v375 = vpack.c.b16 %v347, %v345
        %v376 = vpack.c.b16 %v350, %v348
        %v377 = vpack.c.b16 %v351, %v349
        %v378 = vpack.c.b16 %v354, %v352
        %v379 = vpack.c.b16 %v355, %v353
        %v380 = vpack.c.b16 %v358, %v356
        %v381 = vpack.c.b16 %v359, %v357
        %v382 = vpack.c.b16 %v362, %v360
        %v383 = vpack.c.b16 %v363, %v361
        %v384 = vpack.c.b16 %v366, %v364
        %v385 = vpack.c.b16 %v367, %v365
        %v386 = vpack.c.b16 %v370, %v368
        %v387 = vpack.c.b16 %v371, %v369
        %404 = vmatprep.subr.bf16.mxu0 %v373
        %405 = vmatpush1.bf16.msra.mxu0 %v372
        %406 = vmatprep.subr.bf16.mxu0 %v375
        %407 = vmatpush1.bf16.msra.mxu0 %v374
        %408 = vmatprep.subr.bf16.mxu0 %v377
        %409 = vmatpush1.bf16.msra.mxu0 %v376
        %410 = vmatprep.subr.bf16.mxu0 %v379
        %411 = vmatpush1.bf16.msra.mxu0 %v378
        %412 = vmatprep.subr.bf16.mxu0 %v381
        %413 = vmatpush1.bf16.msra.mxu0 %v380
        %414 = vmatprep.subr.bf16.mxu0 %v383
        %415 = vmatpush1.bf16.msra.mxu0 %v382
        %416 = vmatprep.subr.bf16.mxu0 %v385
        %417 = vmatpush1.bf16.msra.mxu0 %v384
        %418 = vmatprep.subr.bf16.mxu0 %v387
        %419 = vmatpush1.bf16.msra.mxu0 %v386
        %420 = vmatprep.subr.bf16.mxu0 0
        %421 = vmatpush1.bf16.msra.mxu0 0
        %422 = vmatprep.subr.bf16.mxu0 0
        %423 = vmatpush1.bf16.msra.mxu0 0
        %424 = vmatprep.subr.bf16.mxu0 0
        %425 = vmatpush1.bf16.msra.mxu0 0
        %426 = vmatprep.subr.bf16.mxu0 0
        %427 = vmatpush1.bf16.msra.mxu0 0
        %428 = vmatprep.subr.bf16.mxu0 0
        %429 = vmatpush1.bf16.msra.mxu0 0
        %430 = vmatprep.subr.bf16.mxu0 0
        %431 = vmatpush1.bf16.msra.mxu0 0
        %432 = vmatprep.subr.bf16.mxu0 0
        %433 = vmatpush1.bf16.msra.mxu0 0
        %434 = vmatprep.subr.bf16.mxu0 0
        %435 = vmatpush1.bf16.msra.mxu0 0
        %436 = vmatprep.mubr.bf16.mxu0 0
        %437 = vmatmul.mubr.bf16.gmra.mrb[0].mxu0 %v317
        %v438 = vpop.f32.mrb[0].mxu0
        %v439 = vadd.f32 %v322, %v438
        %v440 = vpop.f32.mrb[0].mxu0
        %v441 = vadd.f32 %v322, %v440
        %v442 = vpop.f32.mrb[0].mxu0
        %v443 = vpop.f32.mrb[0].mxu0
        %444 = vdwg.mxu0
        %v445 = vmax.f32 %v439, 0.0
        %v446 = vmax.f32 %v441, 0.0
        %v447 = vld [vmem:[%s3] sm:$0xff]
        %v448 = vld [vmem:[%s4] sm:$0xff]
        %450 = vset.pattern.permute.xlu0 0
        %451 = vperm.xlu0 %450, %v448
        %v452 = vpop.permute.xlu0 %451
        %vm454 = vcmask 64512
        %v456 = vsel %vm454, %v447, 0
        %458 = vmatprep.subr.mxu0 %v446
        %459 = vmatpush1.msra.mxu0 %v445
        %460 = vmatprep.subr.mxu0 0.0
        %461 = vmatpush1.msra.mxu0 0.0
        %462 = vmatprep.subr.mxu0 0.0
        %463 = vmatpush1.msra.mxu0 0.0
        %464 = vmatprep.subr.mxu0 0.0
        %465 = vmatpush1.msra.mxu0 0.0
        %466 = vmatprep.subr.mxu0 0.0
        %467 = vmatpush1.msra.mxu0 0.0
        %468 = vmatprep.subr.mxu0 0.0
        %469 = vmatpush1.msra.mxu0 0.0
        %470 = vmatprep.subr.mxu0 0.0
        %471 = vmatpush1.msra.mxu0 0.0
        %472 = vmatprep.subr.mxu0 0.0
        %473 = vmatpush1.msra.mxu0 0.0
        %474 = vmatprep.subr.mxu0 0.0
        %475 = vmatpush1.msra.mxu0 0.0
        %476 = vmatprep.subr.mxu0 0.0
        %477 = vmatpush1.msra.mxu0 0.0
        %478 = vmatprep.subr.mxu0 0.0
        %479 = vmatpush1.msra.mxu0 0.0
        %480 = vmatprep.subr.mxu0 0.0
        %481 = vmatpush1.msra.mxu0 0.0
        %482 = vmatprep.subr.mxu0 0.0
        %483 = vmatpush1.msra.mxu0 0.0
        %484 = vmatprep.subr.mxu0 0.0
        %485 = vmatpush1.msra.mxu0 0.0
        %486 = vmatprep.subr.mxu0 0.0
        %487 = vmatpush1.msra.mxu0 0.0
        %488 = vmatprep.subr.mxu0 0.0
        %489 = vmatpush1.msra.mxu0 0.0
        %490 = vmatprep.subr.mxu0 0.0
        %491 = vmatpush1.msra.mxu0 0.0
        %492 = vmatprep.subr.mxu0 0.0
        %493 = vmatpush1.msra.mxu0 0.0
        %494 = vmatprep.subr.mxu0 0.0
        %495 = vmatpush1.msra.mxu0 0.0
        %496 = vmatprep.subr.mxu0 0.0
        %497 = vmatpush1.msra.mxu0 0.0
        %498 = vmatprep.subr.mxu0 0.0
        %499 = vmatpush1.msra.mxu0 0.0
        %500 = vmatprep.subr.mxu0 0.0
        %501 = vmatpush1.msra.mxu0 0.0
        %502 = vmatprep.subr.mxu0 0.0
        %503 = vmatpush1.msra.mxu0 0.0
        %504 = vmatprep.subr.mxu0 0.0
        %505 = vmatpush1.msra.mxu0 0.0
        %506 = vmatprep.subr.mxu0 0.0
        %507 = vmatpush1.msra.mxu0 0.0
        %508 = vmatprep.subr.mxu0 0.0
        %509 = vmatpush1.msra.mxu0 0.0
        %510 = vmatprep.subr.mxu0 0.0
        %511 = vmatpush1.msra.mxu0 0.0
        %512 = vmatprep.subr.mxu0 0.0
        %513 = vmatpush1.msra.mxu0 0.0
        %514 = vmatprep.subr.mxu0 0.0
        %515 = vmatpush1.msra.mxu0 0.0
        %516 = vmatprep.subr.mxu0 0.0
        %517 = vmatpush1.msra.mxu0 0.0
        %518 = vmatprep.subr.mxu0 0.0
        %519 = vmatpush1.msra.mxu0 0.0
        %520 = vmatprep.subr.mxu0 0.0
        %521 = vmatpush1.msra.mxu0 0.0
        %522 = vmatprep.mubr.f32.mxu0 0.0
        %523 = vmatmul.mubr.f32.gmra.mrb[0].mxu0 %v456
        %v524 = vpop.f32.mrb[0].mxu0
        %v525 = vadd.f32 %v452, %v524
        %v526 = vpop.f32.mrb[0].mxu0
        %v527 = vadd.f32 %v452, %v526
        %528 = vdwg.mxu0
        %v529 = vmax.f32 %v525, 0.0
        %v530 = vmax.f32 %v527, 0.0
        %v531 = vld [vmem:[%s5] sm:$0x1]
        %s532 = sld [smem:[#allocation2]]
        %v533 = vstv %s532
        %v535 = vsel %vm454, %v531, 0
        %537 = vmatprep.subr.mxu0 %v530
        %538 = vmatpush1.msra.mxu0 %v529
        %539 = vmatprep.subr.mxu0 0.0
        %540 = vmatpush1.msra.mxu0 0.0
        %541 = vmatprep.subr.mxu0 0.0
        %542 = vmatpush1.msra.mxu0 0.0
        %543 = vmatprep.subr.mxu0 0.0
        %544 = vmatpush1.msra.mxu0 0.0
        %545 = vmatprep.subr.mxu0 0.0
        %546 = vmatpush1.msra.mxu0 0.0
        %547 = vmatprep.subr.mxu0 0.0
        %548 = vmatpush1.msra.mxu0 0.0
        %549 = vmatprep.subr.mxu0 0.0
        %550 = vmatpush1.msra.mxu0 0.0
        %551 = vmatprep.subr.mxu0 0.0
        %552 = vmatpush1.msra.mxu0 0.0
        %553 = vmatprep.subr.mxu0 0.0
        %554 = vmatpush1.msra.mxu0 0.0
        %555 = vmatprep.subr.mxu0 0.0
        %556 = vmatpush1.msra.mxu0 0.0
        %557 = vmatprep.subr.mxu0 0.0
        %558 = vmatpush1.msra.mxu0 0.0
        %559 = vmatprep.subr.mxu0 0.0
        %560 = vmatpush1.msra.mxu0 0.0
        %561 = vmatprep.subr.mxu0 0.0
        %562 = vmatpush1.msra.mxu0 0.0
        %563 = vmatprep.subr.mxu0 0.0
        %564 = vmatpush1.msra.mxu0 0.0
        %565 = vmatprep.subr.mxu0 0.0
        %566 = vmatpush1.msra.mxu0 0.0
        %567 = vmatprep.subr.mxu0 0.0
        %568 = vmatpush1.msra.mxu0 0.0
        %569 = vmatprep.subr.mxu0 0.0
        %570 = vmatpush1.msra.mxu0 0.0
        %571 = vmatprep.subr.mxu0 0.0
        %572 = vmatpush1.msra.mxu0 0.0
        %573 = vmatprep.subr.mxu0 0.0
        %574 = vmatpush1.msra.mxu0 0.0
        %575 = vmatprep.subr.mxu0 0.0
        %576 = vmatpush1.msra.mxu0 0.0
        %577 = vmatprep.subr.mxu0 0.0
        %578 = vmatpush1.msra.mxu0 0.0
        %579 = vmatprep.subr.mxu0 0.0
        %580 = vmatpush1.msra.mxu0 0.0
        %581 = vmatprep.subr.mxu0 0.0
        %582 = vmatpush1.msra.mxu0 0.0
        %583 = vmatprep.subr.mxu0 0.0
        %584 = vmatpush1.msra.mxu0 0.0
        %585 = vmatprep.subr.mxu0 0.0
        %586 = vmatpush1.msra.mxu0 0.0
        %587 = vmatprep.subr.mxu0 0.0
        %588 = vmatpush1.msra.mxu0 0.0
        %589 = vmatprep.subr.mxu0 0.0
        %590 = vmatpush1.msra.mxu0 0.0
        %591 = vmatprep.subr.mxu0 0.0
        %592 = vmatpush1.msra.mxu0 0.0
        %593 = vmatprep.subr.mxu0 0.0
        %594 = vmatpush1.msra.mxu0 0.0
        %595 = vmatprep.subr.mxu0 0.0
        %596 = vmatpush1.msra.mxu0 0.0
        %597 = vmatprep.subr.mxu0 0.0
        %598 = vmatpush1.msra.mxu0 0.0
        %599 = vmatprep.subr.mxu0 0.0
        %600 = vmatpush1.msra.mxu0 0.0
        %601 = vmatprep.mubr.f32.mxu0 0.0
        %602 = vmatmul.mubr.f32.gmra.mrb[0].mxu0 %v535
        %v603 = vpop.f32.mrb[0].mxu0
        %v604 = vadd.f32 %v533, %v603
        %v605 = vpop.f32.mrb[0].mxu0
        %v606 = vadd.f32 %v533, %v605
        %607 = vdwg.mxu0
        %v608 = vxor.u32 %v604, 2147483648
        %v609 = vxor.u32 %v606, 2147483648
        %v610 = vmul.f32 %v608, 1.442695
        %v611 = vpow.pop %v610
        %v612 = vmul.f32 %v609, 1.442695
        %v613 = vpow.pop %v612
        %v614 = vadd.f32 %v611, 1.0
        %v615 = vadd.f32 %v613, 1.0
        %v616 = vrcp.pop %v614
        %v617 = vmul.f32 1.0, %v616
        %v618 = vrcp.pop %v615
        %v619 = vmul.f32 1.0, %v618
        %v622 = vcombine.low %v617, %v619
        %v624 = vunpack.c.l.s4 1966171168
        %v625 = vunpack.c.0.s8 %v624
        %v626 = vlaneseq
        %v627 = vshrl.u32 %v626, 7
        %v628 = vsub.s32 %v625, %v627
        %v629 = vrot.slane %v622, %v628
        %v631 = vunpack.c.l.s4 1966171168
        %v632 = vunpack.c.0.s8 %v631
        %v633 = vlaneseq
        %v634 = vshrl.u32 %v633, 7
        %v635 = vsub.s32 %v632, %v634
        %v636 = vrot.slane %v629, %v635
        %v638 = vlaneseq
        %vm639 = vcmp.ge.s32.totalorder %v638, 0
        %vm640 = vcmp.lt.s32.totalorder %v638, 256
        %vm641 = vmand %vm639, %vm640
        %642 = vst.msk [vmem:[%s297] sm:$0x3] %vm641, %v636
        %s643 = sand.u32 %s185, 1
        %s644 = scalar_lea.sflag [#allocation5], %s643
        %s645 = sand.u32 %s185, 1
        %s646 = smul.addr %s645, 2
        %s647 = scalar_lea.vmem [#allocation6], %s646
        // Predicated region
        $region53: #{iris_model_forward.1} parent=47 // pred_check
          %p648 = pneg %p195
        $region54: #{iris_model_forward.1} parent=47 // pred_check_branch
          %650 = sbr.rel (%p648) target = $region56
        $region55: #{iris_model_forward.1} parent=47 // pred_region
          %s651 = smul.u32 2, %s25
          %s653 = ssub.s32 32, 32
          %654 = vsyncadd %s644, %s653
          %s655 = smul.addr %s651, 16
          %s656 = scalar_lea.hbm %s7, %s655
          %s658 = sshll.u32 %s647, 4
          %s659 = int_to_ptr.vmem [resolvable:$true] %s658
          %661 = dma.vmem_to_hbm [thread:$0]  %s659, 32, %s656, %s644
        $region56: #{iris_model_forward.1} parent=47 // pred_fallthru
          _
      $region48: #{iris_model_forward.1} parent=5 // pred_fallthru
        _
      %p662 = scmp.le.s32.totalorder 2, %s20
      // Predicated region
      $region57: #{iris_model_forward.1} parent=5 // pred_check
        %p663 = pneg %p662
      $region58: #{iris_model_forward.1} parent=5 // pred_check_branch
        %665 = sbr.rel (%p663) target = $region60
      $region59: #{iris_model_forward.1} parent=5 // pred_region
        %s666 = ssub.s32 %s20, 2
        // Predicated region
        $region61: #{iris_model_forward.1} parent=59 // pred_check
          %p667 = pneg %p201
        $region62: #{iris_model_forward.1} parent=59 // pred_check_branch
          %669 = sbr.rel (%p667) target = $region64
        $region63: #{iris_model_forward.1} parent=59 // pred_region
          %s670 = sand.u32 %s186, 1
          %s671 = scalar_lea.sflag [#allocation5], %s670
          %s672 = sand.u32 %s186, 1
          %s673 = smul.addr %s672, 2
          %s674 = scalar_lea.vmem [#allocation6], %s673
          %675 = dma.done %s671, 32
        $region64: #{iris_model_forward.1} parent=59 // pred_fallthru
          _
      $region60: #{iris_model_forward.1} parent=5 // pred_fallthru
        _
    $region6: #{iris_model_forward.1} parent=1 // loop_footer
      %s24 = sadd.s32 1, %s20
    $region7: #{iris_model_forward.1} parent=1 // loop_footer_branch
      %19 = sbr.rel target = $region3
    $region8: #{iris_model_forward.1} parent=1 // loop_exit
      _
    %676 = vsyncpa [#allocation4], 1
    %s677 = scalar_lea.sflag [#allocation4], 1
    %678 = vsyncpa %s677, 1
    %679 = vsyncpa [#allocation5], 1
    %s680 = scalar_lea.sflag [#allocation5], 1
    %681 = vsyncpa %s680, 1

</llo_original>
